<compile_context>
chip_gen: v5e
topology: v5e:2x2
jax: 0.10.0
libtpu: 0.0.40
codegen_flags: <defaults>
</compile_context>

<pallas_src>
import math

import numpy as np
import jax
import jax.numpy as jnp
from jax.experimental import pallas as pl
from jax.experimental.pallas import tpu as pltpu


def _pool_matmul_kernel(x_ref, p_ref, o_ref):
    # x_ref: (bg, ko*2W)     packed raw pixels: ko pooled rows per packed row
    # p_ref: (ko*2W, ko*Wo)  static block-diagonal 0.25-tap pooling matrix (bf16)
    # o_ref: (bg, ko*Wo)     lane-dense pooled output rows
    #
    # Explicit bf16 cast pins a single MXU pass; accumulate in f32.  P taps are
    # 0.25 = 2^-2 (exact in bf16), so bf16 inputs are pooled exactly; f32 inputs
    # only see the bf16 rounding of the activations (~2^-9 relative) -- the
    # documented trade-off that keeps v5e memory-bound instead of MXU-bound.
    #
    # When the last grid block is partial, the tail VMEM rows hold stale data;
    # they flow through the (row-independent) matmul and are masked out by the
    # bounded output store, so this is benign.
    x = x_ref[...].astype(jnp.bfloat16)
    acc = jnp.dot(x, p_ref[...], preferred_element_type=jnp.float32)
    o_ref[...] = acc.astype(o_ref.dtype)


def _pick_ko(num_rows, wo, max_lanes=256):
    """Pooled rows packed per flattened row.  Returns (ko, needs_pad).

    Preference:
      1. ko divides R and ko*Wo is an exact multiple of 128 (<= max_lanes):
         unmasked stores, no output lane padding, minimal MXU MACs/element.
      2. ko divides R and ko*Wo >= 128 (smallest such): lane-dense, at most one
         masked tail store.
      3. No usable divisor (rare): pad R up so ko*Wo lands in [128, 128+Wo).
    """
    if wo >= 128:
        return 1, False
    best_exact = None
    best_ge = None
    max_ko = max(1, max_lanes // wo)
    for ko in range(1, min(num_rows, max_ko) + 1):
        if num_rows % ko:
            continue
        lanes = ko * wo
        if lanes % 128 == 0 and (best_exact is None or lanes < best_exact[1]):
            best_exact = (ko, lanes)
        if lanes >= 128 and (best_ge is None or lanes < best_ge[1]):
            best_ge = (ko, lanes)
    if best_exact is not None:
        return best_exact[0], False
    if best_ge is not None:
        return best_ge[0], False
    ko = 128 // math.gcd(wo, 128)
    if ko * wo > max_lanes:
        ko = -(-128 // wo)          # smallest ko with ko*wo >= 128
    return ko, True


def _pick_block_rows(num_rows, row_bytes, target_bytes, sublane_pack, min_steps=8):
    """Largest row-block that (a) stays ~target_bytes, (b) best-effort leaves
    >= min_steps grid steps (pipelining + v7x megacore sharding), and (c) is a
    multiple of the dtype's native sublane packing, or the full extent."""
    bg = max(1, target_bytes // row_bytes)
    bg = min(bg, pl.cdiv(num_rows, min_steps))
    if bg >= num_rows:
        return num_rows                                # full extent: always legal
    bg = max(sublane_pack, (bg // sublane_pack) * sublane_pack)
    return min(bg, num_rows)


def pooling_forward(x, *, block_bytes=8 * 1024 * 1024):
    """Equivalent of F.avg_pool2d(x, kernel_size=2, stride=2, padding=0), NCHW."""
    N, C, H, W = x.shape
    Ho, Wo = H // 2, W // 2
    if Ho == 0 or Wo == 0:
        return jnp.zeros((N, C, Ho, Wo), x.dtype)

    # Odd W is handled inside the pooling matrix (trailing column never tapped),
    # so no pre-slice copy.  Odd H breaks the uniform row stride of the
    # flattened view, so only that case falls back to a slice.
    if H != 2 * Ho:
        x = x[:, :, : 2 * Ho, :]
        H = 2 * Ho

    R = N * C * Ho                        # number of pooled output rows
    ko, needs_pad = _pick_ko(R, Wo)
    G = pl.cdiv(R, ko) if needs_pad else R // ko
    lanes_in = ko * 2 * W                 # raw pixels feeding ko pooled rows
    lanes_out = ko * Wo

    # Zero-copy view (pad path copies once; only hit when R has no usable divisor).
    if needs_pad:
        flat = x.reshape(-1)
        flat = jnp.pad(flat, (0, G * lanes_in - flat.size))
        xg = flat.reshape(G, lanes_in)
    else:
        xg = x.reshape(G, lanes_in)

    # Static pooling matrix, built host-side: column t*Wo + j holds 0.25 at the
    # four taps of local pooled row t, output column j.  Block-diagonal =
    # kron(I_ko, P0).  0.25 = 2^-2 is exact in bf16.
    j = np.arange(Wo)
    p0 = np.zeros((2 * W, Wo), np.float32)
    for taps in (2 * j, 2 * j + 1, W + 2 * j, W + 2 * j + 1):
        p0[taps, j] = 0.25
    p = jnp.asarray(np.kron(np.eye(ko, dtype=np.float32), p0), dtype=jnp.bfloat16)

    itemsize = jnp.dtype(x.dtype).itemsize
    sublane_pack = max(8, 32 // itemsize)          # 8 for f32, 16 for bf16, 32 for int8/fp8
    bg = _pick_block_rows(G, lanes_in * itemsize, block_bytes, sublane_pack)
    grid = (pl.cdiv(G, bg),)

    out = pl.pallas_call(
        _pool_matmul_kernel,
        out_shape=jax.ShapeDtypeStruct((G, lanes_out), x.dtype),
        grid=grid,
        in_specs=[
            pl.BlockSpec((bg, lanes_in), lambda g: (g, 0)),
            # Constant index map -> P is DMA'd once and stays VMEM-resident
            # across grid steps (its double-buffer is only a few hundred KiB).
            pl.BlockSpec((lanes_in, lanes_out), lambda g: (0, 0)),
        ],
        out_specs=pl.BlockSpec((bg, lanes_out), lambda g: (g, 0)),
        compiler_params=pltpu.CompilerParams(
            dimension_semantics=("parallel",),      # megacore-shardable steps
            vmem_limit_bytes=48 * 1024 * 1024,      # <= v7x 64 MiB/TC physical
        ),
    )(xg, p)

    if needs_pad:
        out = out.reshape(G * ko, Wo)[:R]
    return out.reshape(N, C, Ho, Wo)


if __name__ == "__main__":
    key = jax.random.PRNGKey(0)
    k1, k2 = jax.random.split(key)

    def ref_pool(x):
        n, c, h, w = x.shape
        ho, wo = h // 2, w // 2
        return x[:, :, : 2 * ho, : 2 * wo].reshape(n, c, ho, 2, wo, 2).mean(axis=(3, 5))

    # Even spatial dims (main path: ko*Wo == 128 exactly, single grid step here).
    x1 = jax.random.normal(k1, (2, 4, 16, 16), dtype=jnp.float32)   # NCHW
    y1 = pooling_forward(x1)
    jax.block_until_ready(y1)
    assert y1.shape == (2, 4, 8, 8)
    # tolerance covers the deliberate bf16 rounding of f32 activations (~2^-9 rel)
    assert jnp.allclose(y1, ref_pool(x1), atol=2e-2, rtol=2e-2), \
        float(jnp.max(jnp.abs(y1 - ref_pool(x1))))

    # Odd spatial dims: odd W folded into P, odd H sliced.
    x2 = jax.random.normal(k2, (2, 4, 15, 15), dtype=jnp.float32)
    y2 = pooling_forward(x2)
    jax.block_until_ready(y2)
    assert y2.shape == (2, 4, 7, 7)
    assert jnp.allclose(y2, ref_pool(x2), atol=2e-2, rtol=2e-2), \
        float(jnp.max(jnp.abs(y2 - ref_pool(x2))))

    print("KERNEL_OK")
</pallas_src>

<mosaic_0001>
module attributes {stable_mosaic.version = 11 : i64} {
  func.func @_pool_matmul_kernel(%arg0: i32, %arg1: memref<4x512xf32, #tpu.memory_space<vmem>>, %arg2: memref<512x128xbf16, #tpu.memory_space<vmem>>, %arg3: memref<4x128xf32, #tpu.memory_space<vmem>>) attributes {dimension_semantics = [#tpu.dimension_semantics<parallel>], iteration_bounds = array<i64: 1>, scalar_prefetch = 0 : i64, scratch_operands = 0 : i64, tpu.core_type = #tpu.core_type<tc>, window_params = [{transform_indices = @transform_0, window_bounds = array<i64: 4, 512>}, {pipeline_mode = #tpu.pipeline_mode<synchronous>, transform_indices = @transform_1, window_bounds = array<i64: 512, 128>}, {transform_indices = @transform_2, window_bounds = array<i64: 4, 128>}]} {
    %c0 = arith.constant 0 : index
    %c0_0 = arith.constant 0 : index
    %0 = vector.load %arg1[%c0, %c0_0] : memref<4x512xf32, #tpu.memory_space<vmem>>, vector<4x512xf32>
    %1 = arith.truncf %0 : vector<4x512xf32> to vector<4x512xbf16>
    %c0_1 = arith.constant 0 : index
    %c0_2 = arith.constant 0 : index
    %2 = vector.load %arg2[%c0_1, %c0_2] : memref<512x128xbf16, #tpu.memory_space<vmem>>, vector<512x128xbf16>
    %cst = arith.constant dense<0.000000e+00> : vector<4x128xf32>
    %3 = tpu.matmul %1, %2, %cst {dimension_numbers = #tpu.dot_dimension_numbers<[1], [0], [0], [1], [0, 0, 1, 1], [], []>} : vector<4x512xbf16>, vector<512x128xbf16>, vector<4x128xf32> -> vector<4x128xf32>
    %c0_3 = arith.constant 0 : index
    %c0_4 = arith.constant 0 : index
    %4 = vector.load %arg3[%c0_3, %c0_4] : memref<4x128xf32, #tpu.memory_space<vmem>>, vector<4x128xf32>
    tpu.vector_store %arg3[%c0_3, %c0_4], %3 {strides = array<i32>} : memref<4x128xf32, #tpu.memory_space<vmem>>, vector<4x128xf32>,
    return
  }
  func.func @transform_0(%arg0: i32) -> (i32, i32) {
    %c0_i32 = arith.constant 0 : i32
    %c0_i32_0 = arith.constant 0 : i32
    return %arg0, %c0_i32 : i32, i32
  }
  func.func @transform_1(%arg0: i32) -> (i32, i32) {
    %c0_i32 = arith.constant 0 : i32
    %c0_i32_0 = arith.constant 0 : i32
    %c0_i32_1 = arith.constant 0 : i32
    return %c0_i32, %c0_i32_0 : i32, i32
  }
  func.func @transform_2(%arg0: i32) -> (i32, i32) {
    %c0_i32 = arith.constant 0 : i32
    %c0_i32_0 = arith.constant 0 : i32
    return %arg0, %c0_i32 : i32, i32
  }
}

</mosaic_0001>

<llo_original>
// kernel: tpu_custom_call.1
$region0: #{tpu_custom_call.1}
  #allocation0 [shape = 'u32[]', space=smem, size = 0x4, offset = 0x4, fixed_abs, tag = 'smem constant byte address 0x4 - core index']
  #allocation1 [shape = 'u32[72,128]{1,0:T(1,128)}', space=vmem, size = 0x9000, scoped, tag = 'internal scratch']
  %s0 = inlined_call_operand.hbm [shape: f32[4,512], index: 0, kind: input, shape index: {}]
  %s1 = inlined_call_operand.hbm [shape: bf16[512,128], index: 1, kind: input, shape index: {}]
  %s2 = inlined_call_operand.hbm [shape: f32[4,128], index: 2, kind: output, shape index: {}]
  %s3 = sld [smem:[#allocation0]]
  $region26: #{tpu_custom_call.1} parent=0
    _
  %s5 = ssub.s32 1, %s3
  %s6 = scalar_select 0, %s5, %s3
  $region1: #{tpu_custom_call.1} parent=0
    #allocation2 [shape = 'u8[8192]{0}', space=vmem, size = 0x2000, scoped, tag = 'input window, operand 0, single buffered']
    #allocation3 [shape = 's32[1]{0}', space=sflag, size = 0x4, scoped, tag = 'scoped memory for tpu_custom_call.1']
    #allocation4 [shape = 's32[1]{0}', space=sflag, size = 0x4, scoped, tag = 'scoped memory for tpu_custom_call.1']
    #allocation5 [shape = 'u8[131072]{0}', space=vmem, size = 0x20000, scoped, tag = 'input window, operand 1, single buffered']
    #allocation6 [shape = 's32[1]{0}', space=sflag, size = 0x4, scoped, tag = 'scoped memory for tpu_custom_call.1']
    #allocation7 [shape = 'u8[2048]{0}', space=vmem, size = 0x800, scoped, tag = 'output window, operand 0, single buffered']
    %7 = vsyncpa [#allocation3], 0
    %8 = vsyncpa [#allocation6], 0
    %9 = vsyncpa [#allocation4], 0
    // Predicated region
    $region2: #{tpu_custom_call.1} parent=1 // pred_check
      _
    $region3: #{tpu_custom_call.1} parent=1 // pred_check_branch
      %11 = sbr.rel (0) target = $region5
    $region4: #{tpu_custom_call.1} parent=1 // pred_region
      %13 = vsyncadd [#allocation3], 0
      %s15 = sshll.u32 %s0, 4
      %s16 = int_to_ptr.hbm [resolvable:$true] %s15
      %s17 = sshll.u32 [#allocation2], 4
      %s18 = int_to_ptr.vmem [resolvable:$true] %s17
      %20 = dma.hbm_to_vmem [thread:$0]  %s16, 256, %s18, [#allocation3]
    $region5: #{tpu_custom_call.1} parent=1 // pred_fallthru
      _
    // Predicated region
    $region6: #{tpu_custom_call.1} parent=1 // pred_check
      _
    $region7: #{tpu_custom_call.1} parent=1 // pred_check_branch
      %22 = sbr.rel (0) target = $region9
    $region8: #{tpu_custom_call.1} parent=1 // pred_region
      %24 = vsyncadd [#allocation6], 0
      %s25 = sshll.u32 %s1, 4
      %s26 = int_to_ptr.hbm [resolvable:$true] %s25
      %s27 = sshll.u32 [#allocation5], 4
      %s28 = int_to_ptr.vmem [resolvable:$true] %s27
      %33 = dma.hbm_to_vmem [thread:$0]  %s26, 4096, %s28, [#allocation6], 64, 64, 4
    $region9: #{tpu_custom_call.1} parent=1 // pred_fallthru
      _
    // Predicated region
    $region10: #{tpu_custom_call.1} parent=1 // pred_check
      _
    $region11: #{tpu_custom_call.1} parent=1 // pred_check_branch
      %35 = sbr.rel (0) target = $region13
    $region12: #{tpu_custom_call.1} parent=1 // pred_region
      %37 = dma.done [#allocation3], 256
    $region13: #{tpu_custom_call.1} parent=1 // pred_fallthru
      _
    // Predicated region
    $region14: #{tpu_custom_call.1} parent=1 // pred_check
      _
    $region15: #{tpu_custom_call.1} parent=1 // pred_check_branch
      %39 = sbr.rel (0) target = $region17
    $region16: #{tpu_custom_call.1} parent=1 // pred_region
      %41 = dma.done [#allocation6], 4096
    $region17: #{tpu_custom_call.1} parent=1 // pred_fallthru
      _
    %v42 = vld [vmem:[#allocation2] sm:$0xff]
    %v43 = vld [vmem:[#allocation2 + $0x8] sm:$0xff]
    %46 = vst [vmem:[#allocation1] ss:$2 sm:$0xff] %v42
    %s47 = scalar_lea.vmem [#allocation1], 16
    %48 = vst [vmem:[%s47] ss:$2 sm:$0xff] %v43
    %v49 = vld.sshfl [vmem:[#allocation1] sm:$0xff pattern:$0x75316420]
    %v50 = vld.sshfl [vmem:[#allocation1 + $0x8] sm:$0xff pattern:$0x75316420]
    %v51 = vld.sshfl [vmem:[#allocation1 + $0x10] sm:$0xff pattern:$0x75316420]
    %v52 = vld.sshfl [vmem:[#allocation1 + $0x18] sm:$0xff pattern:$0x75316420]
    %v57 = vpack.c.bf16 %v49, %v49
    %v58 = vpack.c.bf16 %v50, %v50
    %v59 = vpack.c.bf16 %v51, %v51
    %v60 = vpack.c.bf16 %v52, %v52
    %v61 = vld [vmem:[#allocation5] sm:$0xf]
    %v62 = vld [vmem:[#allocation5 + $0x4] sm:$0xf]
    %v63 = vld [vmem:[#allocation5 + $0x8] sm:$0xf]
    %v64 = vld [vmem:[#allocation5 + $0xc] sm:$0xf]
    %v65 = vld [vmem:[#allocation5 + $0x10] sm:$0xf]
    %v66 = vld [vmem:[#allocation5 + $0x14] sm:$0xf]
    %v67 = vld [vmem:[#allocation5 + $0x18] sm:$0xf]
    %v68 = vld [vmem:[#allocation5 + $0x1c] sm:$0xf]
    %v69 = vld [vmem:[#allocation5 + $0x20] sm:$0xf]
    %v70 = vld [vmem:[#allocation5 + $0x24] sm:$0xf]
    %v71 = vld [vmem:[#allocation5 + $0x28] sm:$0xf]
    %v72 = vld [vmem:[#allocation5 + $0x2c] sm:$0xf]
    %v73 = vld [vmem:[#allocation5 + $0x30] sm:$0xf]
    %v74 = vld [vmem:[#allocation5 + $0x34] sm:$0xf]
    %v75 = vld [vmem:[#allocation5 + $0x38] sm:$0xf]
    %v76 = vld [vmem:[#allocation5 + $0x3c] sm:$0xf]
    %v77 = vld [vmem:[#allocation5 + $0x40] sm:$0xf]
    %v78 = vld [vmem:[#allocation5 + $0x44] sm:$0xf]
    %v79 = vld [vmem:[#allocation5 + $0x48] sm:$0xf]
    %v80 = vld [vmem:[#allocation5 + $0x4c] sm:$0xf]
    %v81 = vld [vmem:[#allocation5 + $0x50] sm:$0xf]
    %v82 = vld [vmem:[#allocation5 + $0x54] sm:$0xf]
    %v83 = vld [vmem:[#allocation5 + $0x58] sm:$0xf]
    %v84 = vld [vmem:[#allocation5 + $0x5c] sm:$0xf]
    %v85 = vld [vmem:[#allocation5 + $0x60] sm:$0xf]
    %v86 = vld [vmem:[#allocation5 + $0x64] sm:$0xf]
    %v87 = vld [vmem:[#allocation5 + $0x68] sm:$0xf]
    %v88 = vld [vmem:[#allocation5 + $0x6c] sm:$0xf]
    %v89 = vld [vmem:[#allocation5 + $0x70] sm:$0xf]
    %v90 = vld [vmem:[#allocation5 + $0x74] sm:$0xf]
    %v91 = vld [vmem:[#allocation5 + $0x78] sm:$0xf]
    %v92 = vld [vmem:[#allocation5 + $0x7c] sm:$0xf]
    %v93 = vld [vmem:[#allocation5 + $0x80] sm:$0xf]
    %v94 = vld [vmem:[#allocation5 + $0x84] sm:$0xf]
    %v95 = vld [vmem:[#allocation5 + $0x88] sm:$0xf]
    %v96 = vld [vmem:[#allocation5 + $0x8c] sm:$0xf]
    %v97 = vld [vmem:[#allocation5 + $0x90] sm:$0xf]
    %v98 = vld [vmem:[#allocation5 + $0x94] sm:$0xf]
    %v99 = vld [vmem:[#allocation5 + $0x98] sm:$0xf]
    %v100 = vld [vmem:[#allocation5 + $0x9c] sm:$0xf]
    %v101 = vld [vmem:[#allocation5 + $0xa0] sm:$0xf]
    %v102 = vld [vmem:[#allocation5 + $0xa4] sm:$0xf]
    %v103 = vld [vmem:[#allocation5 + $0xa8] sm:$0xf]
    %v104 = vld [vmem:[#allocation5 + $0xac] sm:$0xf]
    %v105 = vld [vmem:[#allocation5 + $0xb0] sm:$0xf]
    %v106 = vld [vmem:[#allocation5 + $0xb4] sm:$0xf]
    %v107 = vld [vmem:[#allocation5 + $0xb8] sm:$0xf]
    %v108 = vld [vmem:[#allocation5 + $0xbc] sm:$0xf]
    %v109 = vld [vmem:[#allocation5 + $0xc0] sm:$0xf]
    %v110 = vld [vmem:[#allocation5 + $0xc4] sm:$0xf]
    %v111 = vld [vmem:[#allocation5 + $0xc8] sm:$0xf]
    %v112 = vld [vmem:[#allocation5 + $0xcc] sm:$0xf]
    %v113 = vld [vmem:[#allocation5 + $0xd0] sm:$0xf]
    %v114 = vld [vmem:[#allocation5 + $0xd4] sm:$0xf]
    %v115 = vld [vmem:[#allocation5 + $0xd8] sm:$0xf]
    %v116 = vld [vmem:[#allocation5 + $0xdc] sm:$0xf]
    %v117 = vld [vmem:[#allocation5 + $0xe0] sm:$0xf]
    %v118 = vld [vmem:[#allocation5 + $0xe4] sm:$0xf]
    %v119 = vld [vmem:[#allocation5 + $0xe8] sm:$0xf]
    %v120 = vld [vmem:[#allocation5 + $0xec] sm:$0xf]
    %v121 = vld [vmem:[#allocation5 + $0xf0] sm:$0xf]
    %v122 = vld [vmem:[#allocation5 + $0xf4] sm:$0xf]
    %v123 = vld [vmem:[#allocation5 + $0xf8] sm:$0xf]
    %v124 = vld [vmem:[#allocation5 + $0xfc] sm:$0xf]
    %v189 = vunpack.c.l.b16 %v61
    %v190 = vunpack.c.l.b16 %v62
    %v191 = vunpack.c.l.b16 %v63
    %v192 = vunpack.c.l.b16 %v64
    %v193 = vunpack.c.l.b16 %v65
    %v194 = vunpack.c.l.b16 %v66
    %v195 = vunpack.c.l.b16 %v67
    %v196 = vunpack.c.l.b16 %v68
    %v197 = vunpack.c.l.b16 %v69
    %v198 = vunpack.c.l.b16 %v70
    %v199 = vunpack.c.l.b16 %v71
    %v200 = vunpack.c.l.b16 %v72
    %v201 = vunpack.c.l.b16 %v73
    %v202 = vunpack.c.l.b16 %v74
    %v203 = vunpack.c.l.b16 %v75
    %v204 = vunpack.c.l.b16 %v76
    %v205 = vunpack.c.l.b16 %v77
    %v206 = vunpack.c.l.b16 %v78
    %v207 = vunpack.c.l.b16 %v79
    %v208 = vunpack.c.l.b16 %v80
    %v209 = vunpack.c.l.b16 %v81
    %v210 = vunpack.c.l.b16 %v82
    %v211 = vunpack.c.l.b16 %v83
    %v212 = vunpack.c.l.b16 %v84
    %v213 = vunpack.c.l.b16 %v85
    %v214 = vunpack.c.l.b16 %v86
    %v215 = vunpack.c.l.b16 %v87
    %v216 = vunpack.c.l.b16 %v88
    %v217 = vunpack.c.l.b16 %v89
    %v218 = vunpack.c.l.b16 %v90
    %v219 = vunpack.c.l.b16 %v91
    %v220 = vunpack.c.l.b16 %v92
    %v221 = vunpack.c.l.b16 %v93
    %v222 = vunpack.c.l.b16 %v94
    %v223 = vunpack.c.l.b16 %v95
    %v224 = vunpack.c.l.b16 %v96
    %v225 = vunpack.c.l.b16 %v97
    %v226 = vunpack.c.l.b16 %v98
    %v227 = vunpack.c.l.b16 %v99
    %v228 = vunpack.c.l.b16 %v100
    %v229 = vunpack.c.l.b16 %v101
    %v230 = vunpack.c.l.b16 %v102
    %v231 = vunpack.c.l.b16 %v103
    %v232 = vunpack.c.l.b16 %v104
    %v233 = vunpack.c.l.b16 %v105
    %v234 = vunpack.c.l.b16 %v106
    %v235 = vunpack.c.l.b16 %v107
    %v236 = vunpack.c.l.b16 %v108
    %v237 = vunpack.c.l.b16 %v109
    %v238 = vunpack.c.l.b16 %v110
    %v239 = vunpack.c.l.b16 %v111
    %v240 = vunpack.c.l.b16 %v112
    %v241 = vunpack.c.l.b16 %v113
    %v242 = vunpack.c.l.b16 %v114
    %v243 = vunpack.c.l.b16 %v115
    %v244 = vunpack.c.l.b16 %v116
    %v245 = vunpack.c.l.b16 %v117
    %v246 = vunpack.c.l.b16 %v118
    %v247 = vunpack.c.l.b16 %v119
    %v248 = vunpack.c.l.b16 %v120
    %v249 = vunpack.c.l.b16 %v121
    %v250 = vunpack.c.l.b16 %v122
    %v251 = vunpack.c.l.b16 %v123
    %v252 = vunpack.c.l.b16 %v124
    %v253 = vpack.c.b16 %v190, %v189
    %v254 = vpack.c.b16 %v192, %v191
    %v255 = vpack.c.b16 %v194, %v193
    %v256 = vpack.c.b16 %v196, %v195
    %v257 = vpack.c.b16 %v198, %v197
    %v258 = vpack.c.b16 %v200, %v199
    %v259 = vpack.c.b16 %v202, %v201
    %v260 = vpack.c.b16 %v204, %v203
    %v261 = vpack.c.b16 %v206, %v205
    %v262 = vpack.c.b16 %v208, %v207
    %v263 = vpack.c.b16 %v210, %v209
    %v264 = vpack.c.b16 %v212, %v211
    %v265 = vpack.c.b16 %v214, %v213
    %v266 = vpack.c.b16 %v216, %v215
    %v267 = vpack.c.b16 %v218, %v217
    %v268 = vpack.c.b16 %v220, %v219
    %v269 = vpack.c.b16 %v222, %v221
    %v270 = vpack.c.b16 %v224, %v223
    %v271 = vpack.c.b16 %v226, %v225
    %v272 = vpack.c.b16 %v228, %v227
    %v273 = vpack.c.b16 %v230, %v229
    %v274 = vpack.c.b16 %v232, %v231
    %v275 = vpack.c.b16 %v234, %v233
    %v276 = vpack.c.b16 %v236, %v235
    %v277 = vpack.c.b16 %v238, %v237
    %v278 = vpack.c.b16 %v240, %v239
    %v279 = vpack.c.b16 %v242, %v241
    %v280 = vpack.c.b16 %v244, %v243
    %v281 = vpack.c.b16 %v246, %v245
    %v282 = vpack.c.b16 %v248, %v247
    %v283 = vpack.c.b16 %v250, %v249
    %v284 = vpack.c.b16 %v252, %v251
    %317 = vmatpush.bf16.msra.mxu0 %v260
    %318 = vmatpush.bf16.msra.mxu0 %v259
    %319 = vmatpush.bf16.msra.mxu0 %v258
    %320 = vmatpush.bf16.msra.mxu0 %v257
    %321 = vmatpush.bf16.msra.mxu0 %v256
    %322 = vmatpush.bf16.msra.mxu0 %v255
    %323 = vmatpush.bf16.msra.mxu0 %v254
    %324 = vmatpush.bf16.msra.mxu0 %v253
    %325 = vmatmul.bf16.gmra.mxu0 %v57
    %v326 = vpop.f32.mrf.mxu0
    %v327 = vadd.f32 0.0, %v326
    %v328 = vpop.f32.mrf.mxu0
    %329 = vdwg.mxu0
    %330 = vmatpush.bf16.msra.mxu0 %v268
    %331 = vmatpush.bf16.msra.mxu0 %v267
    %332 = vmatpush.bf16.msra.mxu0 %v266
    %333 = vmatpush.bf16.msra.mxu0 %v265
    %334 = vmatpush.bf16.msra.mxu0 %v264
    %335 = vmatpush.bf16.msra.mxu0 %v263
    %336 = vmatpush.bf16.msra.mxu0 %v262
    %337 = vmatpush.bf16.msra.mxu0 %v261
    %338 = vmatmul.bf16.gmra.mxu0 %v58
    %v339 = vpop.f32.mrf.mxu0
    %v340 = vadd.f32 %v327, %v339
    %v341 = vpop.f32.mrf.mxu0
    %342 = vdwg.mxu0
    %343 = vmatpush.bf16.msra.mxu0 %v276
    %344 = vmatpush.bf16.msra.mxu0 %v275
    %345 = vmatpush.bf16.msra.mxu0 %v274
    %346 = vmatpush.bf16.msra.mxu0 %v273
    %347 = vmatpush.bf16.msra.mxu0 %v272
    %348 = vmatpush.bf16.msra.mxu0 %v271
    %349 = vmatpush.bf16.msra.mxu0 %v270
    %350 = vmatpush.bf16.msra.mxu0 %v269
    %351 = vmatmul.bf16.gmra.mxu0 %v59
    %v352 = vpop.f32.mrf.mxu0
    %v353 = vadd.f32 %v340, %v352
    %v354 = vpop.f32.mrf.mxu0
    %355 = vdwg.mxu0
    %356 = vmatpush.bf16.msra.mxu0 %v284
    %357 = vmatpush.bf16.msra.mxu0 %v283
    %358 = vmatpush.bf16.msra.mxu0 %v282
    %359 = vmatpush.bf16.msra.mxu0 %v281
    %360 = vmatpush.bf16.msra.mxu0 %v280
    %361 = vmatpush.bf16.msra.mxu0 %v279
    %362 = vmatpush.bf16.msra.mxu0 %v278
    %363 = vmatpush.bf16.msra.mxu0 %v277
    %364 = vmatmul.bf16.gmra.mxu0 %v60
    %v365 = vpop.f32.mrf.mxu0
    %v366 = vadd.f32 %v353, %v365
    %v367 = vpop.f32.mrf.mxu0
    %368 = vdwg.mxu0
    %369 = vst [vmem:[#allocation7] sm:$0xf] %v366
    // Predicated region
    $region18: #{tpu_custom_call.1} parent=1 // pred_check
      _
    $region19: #{tpu_custom_call.1} parent=1 // pred_check_branch
      %371 = sbr.rel (0) target = $region21
    $region20: #{tpu_custom_call.1} parent=1 // pred_region
      %373 = vsyncadd [#allocation4], 0
      %s375 = sshll.u32 [#allocation7], 4
      %s376 = int_to_ptr.vmem [resolvable:$true] %s375
      %s377 = sshll.u32 %s2, 4
      %s378 = int_to_ptr.hbm [resolvable:$true] %s377
      %380 = dma.vmem_to_hbm [thread:$0]  %s376, 64, %s378, [#allocation4]
    $region21: #{tpu_custom_call.1} parent=1 // pred_fallthru
      _
    // Predicated region
    $region22: #{tpu_custom_call.1} parent=1 // pred_check
      _
    $region23: #{tpu_custom_call.1} parent=1 // pred_check_branch
      %382 = sbr.rel (0) target = $region25
    $region24: #{tpu_custom_call.1} parent=1 // pred_region
      %384 = dma.done [#allocation4], 64
    $region25: #{tpu_custom_call.1} parent=1 // pred_fallthru
      _
    %385 = vsyncpa [#allocation3], 1
    %386 = vsyncpa [#allocation6], 1
    %387 = vsyncpa [#allocation4], 1

</llo_original>
